<compile_context>
chip_gen: v5e
topology: v5e:2x2
jax: 0.10.0
libtpu: 0.0.40
codegen_flags: <defaults>
</compile_context>

<pallas_src>
import math
import jax
import jax.numpy as jnp
from jax import lax
from jax.experimental import pallas as pl
from jax.experimental.pallas import tpu as pltpu


def make_mha_kernel(emb_size: int, num_heads: int):
    scale = 1.0 / math.sqrt(float(emb_size))  # softmax(energy / sqrt(emb_size))

    def mha_kernel(x_ref, wq_ref, bq_ref, wk_ref, bk_ref, wv_ref, bv_ref,
                   wp_ref, bp_ref, o_ref):
        h = pl.program_id(1)

        # x block: (1, N, E) -> (N, E); bf16 feed for the MXU.
        x = x_ref[0].astype(jnp.bfloat16)

        # Per-head projections: bf16 inputs, f32 accumulation.
        q = jnp.dot(x, wq_ref[0], preferred_element_type=jnp.float32) + bq_ref[0]
        k = jnp.dot(x, wk_ref[0], preferred_element_type=jnp.float32) + bk_ref[0]
        v = jnp.dot(x, wv_ref[0], preferred_element_type=jnp.float32) + bv_ref[0]

        # Fold the softmax scaling into q once: N*D multiplies instead of N*N.
        q = q * scale

        # energy[a, b] = sum_d q[a, d] * k[b, d] -- contraction over the last
        # dim of both operands, no transpose materialized.
        energy = lax.dot_general(
            q.astype(jnp.bfloat16), k.astype(jnp.bfloat16),
            dimension_numbers=(((1,), (1,)), ((), ())),
            preferred_element_type=jnp.float32)                  # (N, N)

        # Softmax in f32; approx reciprocal runs on the (otherwise idle) EUP.
        m = jnp.max(energy, axis=-1, keepdims=True)
        e = jnp.exp(energy - m)
        att = e * pl.reciprocal(jnp.sum(e, axis=-1, keepdims=True), approx=True)

        # att @ V, then this head's slice of the output projection.
        oh = jnp.dot(att.astype(jnp.bfloat16), v.astype(jnp.bfloat16),
                     preferred_element_type=jnp.float32)         # (N, D)
        ph = jnp.dot(oh.astype(jnp.bfloat16), wp_ref[0],
                     preferred_element_type=jnp.float32)         # (N, E)

        # Accumulate per-head projected contributions in the resident output
        # block (head axis is the innermost "arbitrary" grid axis).
        @pl.when(h == 0)
        def _():
            o_ref[0] = ph + bp_ref[...]

        @pl.when(h > 0)
        def _():
            o_ref[0] = o_ref[0] + ph

    return mha_kernel


def multi_head_attention(x, params, *, emb_size, num_heads):
    """x: (B, N, E) float32.  params: dict with wq,bq,wk,bk,wv,bv,wp,bp.

    Weights are stored PyTorch-style as (out, in); the wrapper transposes and
    splits the head axis so the kernel loads only one head's slice per step.
    """
    B, N, E = x.shape
    assert E == emb_size and E % num_heads == 0
    assert x.dtype == jnp.float32
    H, D = num_heads, E // num_heads
    f32, bf16 = jnp.float32, jnp.bfloat16

    # (out, in) -> (in, out), split output features into (H, E, D) per head.
    wq3 = params["wq"].T.reshape(E, H, D).transpose(1, 0, 2).astype(bf16)
    wk3 = params["wk"].T.reshape(E, H, D).transpose(1, 0, 2).astype(bf16)
    wv3 = params["wv"].T.reshape(E, H, D).transpose(1, 0, 2).astype(bf16)
    # Projection consumes the concatenated heads: split input features (H, D, E).
    wp3 = params["wp"].T.reshape(H, D, E).astype(bf16)
    bq3 = params["bq"].reshape(H, 1, D).astype(f32)
    bk3 = params["bk"].reshape(H, 1, D).astype(f32)
    bv3 = params["bv"].reshape(H, 1, D).astype(f32)
    bp2 = params["bp"].reshape(1, E).astype(f32)

    kernel = make_mha_kernel(emb_size, num_heads)

    x_spec = pl.BlockSpec((1, N, E), lambda b, h: (b, 0, 0))
    o_spec = pl.BlockSpec((1, N, E), lambda b, h: (b, 0, 0))
    w_spec = pl.BlockSpec((1, E, D), lambda b, h: (h, 0, 0))
    wp_spec = pl.BlockSpec((1, D, E), lambda b, h: (h, 0, 0))
    bh_spec = pl.BlockSpec((1, 1, D), lambda b, h: (h, 0, 0))
    bp_spec = pl.BlockSpec((1, E), lambda b, h: (0, 0))

    # Rough per-step VMEM footprint (double-buffered pipelined operands plus
    # in-kernel temporaries); clamp to [32 MiB default, 64 MiB v7x physical].
    blk = (2 * 2 * (N * E * 4)            # x + out blocks, double-buffered f32
           + 2 * (4 * E * D * 2)          # per-head weight slices, bf16
           + 2 * ((3 * D + E) * 4)        # biases, f32
           + 2 * (N * N * 4)              # energy / att temporaries
           + 6 * (N * D * 4))             # q, k, v, oh temporaries
    vmem_limit = int(min(max(2 * blk, 32 * 1024 * 1024), 64 * 1024 * 1024))

    return pl.pallas_call(
        kernel,
        out_shape=jax.ShapeDtypeStruct((B, N, E), x.dtype),
        grid_spec=pltpu.PrefetchScalarGridSpec(
            num_scalar_prefetch=0,
            grid=(B, H),
            in_specs=[x_spec,
                      w_spec, bh_spec,     # Wq, bq
                      w_spec, bh_spec,     # Wk, bk
                      w_spec, bh_spec,     # Wv, bv
                      wp_spec, bp_spec],   # Wp, bp
            out_specs=o_spec),
        compiler_params=pltpu.CompilerParams(
            dimension_semantics=("parallel", "arbitrary"),
            vmem_limit_bytes=vmem_limit),
    )(x, wq3, bq3, wk3, bk3, wv3, bv3, wp3, bp2)


def reference_mha(x, params, *, emb_size, num_heads):
    B, N, E = x.shape
    D = E // num_heads
    def lin(x, w, b):
        return jnp.einsum("bne,oe->bno", x, w) + b
    q = lin(x, params["wq"], params["bq"]).reshape(B, N, num_heads, D).transpose(0, 2, 1, 3)
    k = lin(x, params["wk"], params["bk"]).reshape(B, N, num_heads, D).transpose(0, 2, 1, 3)
    v = lin(x, params["wv"], params["bv"]).reshape(B, N, num_heads, D).transpose(0, 2, 1, 3)
    energy = jnp.einsum("bhqd,bhkd->bhqk", q, k)
    att = jax.nn.softmax(energy / math.sqrt(emb_size), axis=-1)
    out = jnp.einsum("bhal,bhlv->bhav", att, v)
    out = out.transpose(0, 2, 1, 3).reshape(B, N, E)
    return lin(out, params["wp"], params["bp"])


if __name__ == "__main__":
    B, N, E, H = 2, 8, 32, 4     # batch, seq, emb_size, num_heads

    key = jax.random.PRNGKey(0)
    keys = jax.random.split(key, 9)
    x = jax.random.normal(keys[0], (B, N, E), dtype=jnp.float32)

    # PyTorch nn.Linear weight shape is (out_features, in_features)
    s = 1.0 / math.sqrt(E)
    params = {
        "wq": jax.random.uniform(keys[1], (E, E), jnp.float32, -s, s),
        "bq": jax.random.uniform(keys[2], (E,),   jnp.float32, -s, s),
        "wk": jax.random.uniform(keys[3], (E, E), jnp.float32, -s, s),
        "bk": jax.random.uniform(keys[4], (E,),   jnp.float32, -s, s),
        "wv": jax.random.uniform(keys[5], (E, E), jnp.float32, -s, s),
        "bv": jax.random.uniform(keys[6], (E,),   jnp.float32, -s, s),
        "wp": jax.random.uniform(keys[7], (E, E), jnp.float32, -s, s),
        "bp": jax.random.uniform(keys[8], (E,),   jnp.float32, -s, s),
    }

    out = multi_head_attention(x, params, emb_size=E, num_heads=H)
    out = jax.block_until_ready(out)

    ref = reference_mha(x, params, emb_size=E, num_heads=H)
    assert out.shape == (B, N, E)
    # bf16 MXU inputs + approx reciprocal -> compare with bf16-level tolerance.
    assert jnp.allclose(out, ref, atol=2e-2, rtol=2e-2), "mismatch vs reference"

    print("KERNEL_OK")
</pallas_src>

<mosaic_0001>
module attributes {stable_mosaic.version = 11 : i64} {
  func.func @mha_kernel(%arg0: i32, %arg1: i32, %arg2: memref<1x8x32xf32, #tpu.memory_space<vmem>>, %arg3: memref<1x32x8xbf16, #tpu.memory_space<vmem>>, %arg4: memref<1x1x8xf32, #tpu.memory_space<vmem>>, %arg5: memref<1x32x8xbf16, #tpu.memory_space<vmem>>, %arg6: memref<1x1x8xf32, #tpu.memory_space<vmem>>, %arg7: memref<1x32x8xbf16, #tpu.memory_space<vmem>>, %arg8: memref<1x1x8xf32, #tpu.memory_space<vmem>>, %arg9: memref<1x8x32xbf16, #tpu.memory_space<vmem>>, %arg10: memref<1x32xf32, #tpu.memory_space<vmem>>, %arg11: memref<1x8x32xf32, #tpu.memory_space<vmem>>) attributes {dimension_semantics = [#tpu.dimension_semantics<parallel>, #tpu.dimension_semantics<arbitrary>], iteration_bounds = array<i64: 2, 4>, scalar_prefetch = 0 : i64, scratch_operands = 0 : i64, tpu.core_type = #tpu.core_type<tc>, window_params = [{transform_indices = @transform_0, window_bounds = array<i64: 1, 8, 32>}, {transform_indices = @transform_1, window_bounds = array<i64: 1, 32, 8>}, {transform_indices = @transform_2, window_bounds = array<i64: 1, 1, 8>}, {transform_indices = @transform_3, window_bounds = array<i64: 1, 32, 8>}, {transform_indices = @transform_4, window_bounds = array<i64: 1, 1, 8>}, {transform_indices = @transform_5, window_bounds = array<i64: 1, 32, 8>}, {transform_indices = @transform_6, window_bounds = array<i64: 1, 1, 8>}, {transform_indices = @transform_7, window_bounds = array<i64: 1, 8, 32>}, {pipeline_mode = #tpu.pipeline_mode<synchronous>, transform_indices = @transform_8, window_bounds = array<i64: 1, 32>}, {transform_indices = @transform_9, window_bounds = array<i64: 1, 8, 32>}]} {
    %c0 = arith.constant 0 : index
    %c0_0 = arith.constant 0 : index
    %c0_1 = arith.constant 0 : index
    %0 = vector.load %arg2[%c0, %c0_0, %c0_1] : memref<1x8x32xf32, #tpu.memory_space<vmem>>, vector<1x8x32xf32>
    %1 = vector.shape_cast %0 : vector<1x8x32xf32> to vector<8x32xf32>
    %2 = arith.truncf %1 : vector<8x32xf32> to vector<8x32xbf16>
    %c0_2 = arith.constant 0 : index
    %c0_3 = arith.constant 0 : index
    %c0_4 = arith.constant 0 : index
    %3 = vector.load %arg3[%c0_2, %c0_3, %c0_4] : memref<1x32x8xbf16, #tpu.memory_space<vmem>>, vector<1x32x8xbf16>
    %4 = vector.shape_cast %3 : vector<1x32x8xbf16> to vector<32x8xbf16>
    %cst = arith.constant dense<0.000000e+00> : vector<8x8xf32>
    %5 = tpu.matmul %2, %4, %cst {dimension_numbers = #tpu.dot_dimension_numbers<[1], [0], [0], [1], [0, 0, 1, 1], [], []>} : vector<8x32xbf16>, vector<32x8xbf16>, vector<8x8xf32> -> vector<8x8xf32>
    %c0_5 = arith.constant 0 : index
    %c0_6 = arith.constant 0 : index
    %c0_7 = arith.constant 0 : index
    %6 = vector.load %arg4[%c0_5, %c0_6, %c0_7] : memref<1x1x8xf32, #tpu.memory_space<vmem>>, vector<1x1x8xf32>
    %7 = vector.shape_cast %6 : vector<1x1x8xf32> to vector<1x8xf32>
    %8 = vector.broadcast %7 : vector<1x8xf32> to vector<8x8xf32>
    %9 = arith.addf %5, %8 : vector<8x8xf32>
    %c0_8 = arith.constant 0 : index
    %c0_9 = arith.constant 0 : index
    %c0_10 = arith.constant 0 : index
    %10 = vector.load %arg5[%c0_8, %c0_9, %c0_10] : memref<1x32x8xbf16, #tpu.memory_space<vmem>>, vector<1x32x8xbf16>
    %11 = vector.shape_cast %10 : vector<1x32x8xbf16> to vector<32x8xbf16>
    %cst_11 = arith.constant dense<0.000000e+00> : vector<8x8xf32>
    %12 = tpu.matmul %2, %11, %cst_11 {dimension_numbers = #tpu.dot_dimension_numbers<[1], [0], [0], [1], [0, 0, 1, 1], [], []>} : vector<8x32xbf16>, vector<32x8xbf16>, vector<8x8xf32> -> vector<8x8xf32>
    %c0_12 = arith.constant 0 : index
    %c0_13 = arith.constant 0 : index
    %c0_14 = arith.constant 0 : index
    %13 = vector.load %arg6[%c0_12, %c0_13, %c0_14] : memref<1x1x8xf32, #tpu.memory_space<vmem>>, vector<1x1x8xf32>
    %14 = vector.shape_cast %13 : vector<1x1x8xf32> to vector<1x8xf32>
    %15 = vector.broadcast %14 : vector<1x8xf32> to vector<8x8xf32>
    %16 = arith.addf %12, %15 : vector<8x8xf32>
    %c0_15 = arith.constant 0 : index
    %c0_16 = arith.constant 0 : index
    %c0_17 = arith.constant 0 : index
    %17 = vector.load %arg7[%c0_15, %c0_16, %c0_17] : memref<1x32x8xbf16, #tpu.memory_space<vmem>>, vector<1x32x8xbf16>
    %18 = vector.shape_cast %17 : vector<1x32x8xbf16> to vector<32x8xbf16>
    %cst_18 = arith.constant dense<0.000000e+00> : vector<8x8xf32>
    %19 = tpu.matmul %2, %18, %cst_18 {dimension_numbers = #tpu.dot_dimension_numbers<[1], [0], [0], [1], [0, 0, 1, 1], [], []>} : vector<8x32xbf16>, vector<32x8xbf16>, vector<8x8xf32> -> vector<8x8xf32>
    %c0_19 = arith.constant 0 : index
    %c0_20 = arith.constant 0 : index
    %c0_21 = arith.constant 0 : index
    %20 = vector.load %arg8[%c0_19, %c0_20, %c0_21] : memref<1x1x8xf32, #tpu.memory_space<vmem>>, vector<1x1x8xf32>
    %21 = vector.shape_cast %20 : vector<1x1x8xf32> to vector<1x8xf32>
    %22 = vector.broadcast %21 : vector<1x8xf32> to vector<8x8xf32>
    %23 = arith.addf %19, %22 : vector<8x8xf32>
    %cst_22 = arith.constant 0.176776692 : f32
    %24 = vector.broadcast %cst_22 : f32 to vector<8x8xf32>
    %25 = arith.mulf %9, %24 : vector<8x8xf32>
    %26 = arith.truncf %25 : vector<8x8xf32> to vector<8x8xbf16>
    %27 = arith.truncf %16 : vector<8x8xf32> to vector<8x8xbf16>
    %cst_23 = arith.constant dense<0.000000e+00> : vector<8x8xf32>
    %28 = tpu.matmul %26, %27, %cst_23 {dimension_numbers = #tpu.dot_dimension_numbers<[1], [1], [0], [0], [0, 0, 1, 0], [], []>} : vector<8x8xbf16>, vector<8x8xbf16>, vector<8x8xf32> -> vector<8x8xf32>
    %cst_24 = arith.constant dense<0xFF800000> : vector<8xf32>
    %29 = vector.multi_reduction <maximumf>, %28, %cst_24 [1] : vector<8x8xf32> to vector<8xf32>
    %30 = vector.shape_cast %29 : vector<8xf32> to vector<8x1xf32>
    %31 = vector.broadcast %30 : vector<8x1xf32> to vector<8x8xf32>
    %32 = arith.subf %28, %31 : vector<8x8xf32>
    %33 = math.exp %32 : vector<8x8xf32>
    %cst_25 = arith.constant dense<0.000000e+00> : vector<8xf32>
    %34 = vector.multi_reduction <add>, %33, %cst_25 [1] : vector<8x8xf32> to vector<8xf32>
    %35 = vector.shape_cast %34 : vector<8xf32> to vector<8x1xf32>
    %36 = tpu.reciprocal %35 {approx = true} : vector<8x1xf32> -> vector<8x1xf32>
    %37 = vector.broadcast %36 : vector<8x1xf32> to vector<8x8xf32>
    %38 = arith.mulf %33, %37 : vector<8x8xf32>
    %39 = arith.truncf %38 : vector<8x8xf32> to vector<8x8xbf16>
    %40 = arith.truncf %23 : vector<8x8xf32> to vector<8x8xbf16>
    %cst_26 = arith.constant dense<0.000000e+00> : vector<8x8xf32>
    %41 = tpu.matmul %39, %40, %cst_26 {dimension_numbers = #tpu.dot_dimension_numbers<[1], [0], [0], [1], [0, 0, 1, 1], [], []>} : vector<8x8xbf16>, vector<8x8xbf16>, vector<8x8xf32> -> vector<8x8xf32>
    %42 = arith.truncf %41 : vector<8x8xf32> to vector<8x8xbf16>
    %c0_27 = arith.constant 0 : index
    %c0_28 = arith.constant 0 : index
    %c0_29 = arith.constant 0 : index
    %43 = vector.load %arg9[%c0_27, %c0_28, %c0_29] : memref<1x8x32xbf16, #tpu.memory_space<vmem>>, vector<1x8x32xbf16>
    %44 = vector.shape_cast %43 : vector<1x8x32xbf16> to vector<8x32xbf16>
    %cst_30 = arith.constant dense<0.000000e+00> : vector<8x32xf32>
    %45 = tpu.matmul %42, %44, %cst_30 {dimension_numbers = #tpu.dot_dimension_numbers<[1], [0], [0], [1], [0, 0, 1, 1], [], []>} : vector<8x8xbf16>, vector<8x32xbf16>, vector<8x32xf32> -> vector<8x32xf32>
    %c0_i32 = arith.constant 0 : i32
    %46 = arith.cmpi eq, %arg1, %c0_i32 : i32
    %47 = arith.extui %46 : i1 to i32
    %c0_i32_31 = arith.constant 0 : i32
    %48 = arith.cmpi ne, %47, %c0_i32_31 : i32
    scf.if %48 {
      %c0_34 = arith.constant 0 : index
      %c0_35 = arith.constant 0 : index
      %52 = vector.load %arg10[%c0_34, %c0_35] : memref<1x32xf32, #tpu.memory_space<vmem>>, vector<1x32xf32>
      %53 = vector.broadcast %52 : vector<1x32xf32> to vector<8x32xf32>
      %54 = arith.addf %45, %53 : vector<8x32xf32>
      %c0_36 = arith.constant 0 : index
      %c0_37 = arith.constant 0 : index
      %c0_38 = arith.constant 0 : index
      %55 = vector.load %arg11[%c0_36, %c0_37, %c0_38] : memref<1x8x32xf32, #tpu.memory_space<vmem>>, vector<1x8x32xf32>
      %56 = vector.shape_cast %55 : vector<1x8x32xf32> to vector<8x32xf32>
      %57 = vector.shape_cast %54 : vector<8x32xf32> to vector<1x8x32xf32>
      tpu.vector_store %arg11[%c0_36, %c0_37, %c0_38], %57 {strides = array<i32>} : memref<1x8x32xf32, #tpu.memory_space<vmem>>, vector<1x8x32xf32>,
    } else {
    }
    %c0_i32_32 = arith.constant 0 : i32
    %49 = arith.cmpi sgt, %arg1, %c0_i32_32 : i32
    %50 = arith.extui %49 : i1 to i32
    %c0_i32_33 = arith.constant 0 : i32
    %51 = arith.cmpi ne, %50, %c0_i32_33 : i32
    scf.if %51 {
      %c0_34 = arith.constant 0 : index
      %c0_35 = arith.constant 0 : index
      %c0_36 = arith.constant 0 : index
      %52 = vector.load %arg11[%c0_34, %c0_35, %c0_36] : memref<1x8x32xf32, #tpu.memory_space<vmem>>, vector<1x8x32xf32>
      %53 = vector.shape_cast %52 : vector<1x8x32xf32> to vector<8x32xf32>
      %54 = arith.addf %53, %45 : vector<8x32xf32>
      %c0_37 = arith.constant 0 : index
      %c0_38 = arith.constant 0 : index
      %c0_39 = arith.constant 0 : index
      %55 = vector.load %arg11[%c0_37, %c0_38, %c0_39] : memref<1x8x32xf32, #tpu.memory_space<vmem>>, vector<1x8x32xf32>
      %56 = vector.shape_cast %55 : vector<1x8x32xf32> to vector<8x32xf32>
      %57 = vector.shape_cast %54 : vector<8x32xf32> to vector<1x8x32xf32>
      tpu.vector_store %arg11[%c0_37, %c0_38, %c0_39], %57 {strides = array<i32>} : memref<1x8x32xf32, #tpu.memory_space<vmem>>, vector<1x8x32xf32>,
    } else {
    }
    return
  }
  func.func @transform_0(%arg0: i32, %arg1: i32) -> (i32, i32, i32) {
    %c0_i32 = arith.constant 0 : i32
    %c0_i32_0 = arith.constant 0 : i32
    %c0_i32_1 = arith.constant 0 : i32
    return %arg0, %c0_i32, %c0_i32_0 : i32, i32, i32
  }
  func.func @transform_1(%arg0: i32, %arg1: i32) -> (i32, i32, i32) {
    %c0_i32 = arith.constant 0 : i32
    %c0_i32_0 = arith.constant 0 : i32
    %c0_i32_1 = arith.constant 0 : i32
    return %arg1, %c0_i32, %c0_i32_0 : i32, i32, i32
  }
  func.func @transform_2(%arg0: i32, %arg1: i32) -> (i32, i32, i32) {
    %c0_i32 = arith.constant 0 : i32
    %c0_i32_0 = arith.constant 0 : i32
    %c0_i32_1 = arith.constant 0 : i32
    return %arg1, %c0_i32, %c0_i32_0 : i32, i32, i32
  }
  func.func @transform_3(%arg0: i32, %arg1: i32) -> (i32, i32, i32) {
    %c0_i32 = arith.constant 0 : i32
    %c0_i32_0 = arith.constant 0 : i32
    %c0_i32_1 = arith.constant 0 : i32
    return %arg1, %c0_i32, %c0_i32_0 : i32, i32, i32
  }
  func.func @transform_4(%arg0: i32, %arg1: i32) -> (i32, i32, i32) {
    %c0_i32 = arith.constant 0 : i32
    %c0_i32_0 = arith.constant 0 : i32
    %c0_i32_1 = arith.constant 0 : i32
    return %arg1, %c0_i32, %c0_i32_0 : i32, i32, i32
  }
  func.func @transform_5(%arg0: i32, %arg1: i32) -> (i32, i32, i32) {
    %c0_i32 = arith.constant 0 : i32
    %c0_i32_0 = arith.constant 0 : i32
    %c0_i32_1 = arith.constant 0 : i32
    return %arg1, %c0_i32, %c0_i32_0 : i32, i32, i32
  }
  func.func @transform_6(%arg0: i32, %arg1: i32) -> (i32, i32, i32) {
    %c0_i32 = arith.constant 0 : i32
    %c0_i32_0 = arith.constant 0 : i32
    %c0_i32_1 = arith.constant 0 : i32
    return %arg1, %c0_i32, %c0_i32_0 : i32, i32, i32
  }
  func.func @transform_7(%arg0: i32, %arg1: i32) -> (i32, i32, i32) {
    %c0_i32 = arith.constant 0 : i32
    %c0_i32_0 = arith.constant 0 : i32
    %c0_i32_1 = arith.constant 0 : i32
    return %arg1, %c0_i32, %c0_i32_0 : i32, i32, i32
  }
  func.func @transform_8(%arg0: i32, %arg1: i32) -> (i32, i32) {
    %c0_i32 = arith.constant 0 : i32
    %c0_i32_0 = arith.constant 0 : i32
    %c0_i32_1 = arith.constant 0 : i32
    return %c0_i32, %c0_i32_0 : i32, i32
  }
  func.func @transform_9(%arg0: i32, %arg1: i32) -> (i32, i32, i32) {
    %c0_i32 = arith.constant 0 : i32
    %c0_i32_0 = arith.constant 0 : i32
    %c0_i32_1 = arith.constant 0 : i32
    return %arg0, %c0_i32, %c0_i32_0 : i32, i32, i32
  }
}

</mosaic_0001>

<llo_original>
// kernel: tpu_custom_call.1
$region0: #{tpu_custom_call.1}
  #allocation0 [shape = 'u32[]', space=smem, size = 0x4, offset = 0x4, fixed_abs, tag = 'smem constant byte address 0x4 - core index']
  #allocation1 [shape = 'u32[72,128]{1,0:T(1,128)}', space=vmem, size = 0x9000, scoped, tag = 'internal scratch']
  %s0 = inlined_call_operand.vmem [shape: f32[2,8,32], index: 0, kind: input, shape index: {}]
  %s1 = inlined_call_operand.vmem [shape: bf16[4,32,8], index: 1, kind: input, shape index: {}]
  %s2 = inlined_call_operand.vmem [shape: f32[4,1,8], index: 2, kind: input, shape index: {}]
  %s3 = inlined_call_operand.vmem [shape: bf16[4,32,8], index: 3, kind: input, shape index: {}]
  %s4 = inlined_call_operand.vmem [shape: f32[4,1,8], index: 4, kind: input, shape index: {}]
  %s5 = inlined_call_operand.vmem [shape: bf16[4,32,8], index: 5, kind: input, shape index: {}]
  %s6 = inlined_call_operand.vmem [shape: f32[4,1,8], index: 6, kind: input, shape index: {}]
  %s7 = inlined_call_operand.vmem [shape: bf16[4,8,32], index: 7, kind: input, shape index: {}]
  %s8 = inlined_call_operand.vmem [shape: f32[1,32], index: 8, kind: input, shape index: {}]
  %s9 = inlined_call_operand.hbm [shape: f32[2,8,32], index: 9, kind: output, shape index: {}]
  %s10 = sld [smem:[#allocation0]]
  $region77: #{tpu_custom_call.1} parent=0
    _
  %s12 = ssub.s32 1, %s10
  %s13 = scalar_select 0, %s12, %s10
  $region1: #{tpu_custom_call.1} parent=0
    #allocation2 [shape = 'u8[8192]{0}', space=vmem, size = 0x2000, scoped, tag = 'output window, operand 0']
    #allocation3 [shape = 's32[2]{0}', space=sflag, size = 0x8, scoped, tag = 'scoped memory for tpu_custom_call.1']
    %14 = vsyncpa [#allocation3], 0
    %s15 = scalar_lea.sflag [#allocation3], 1
    %16 = vsyncpa %s15, 0
    loop: start=0, step=1, limit=10
    $region2: #{tpu_custom_call.1} parent=1 // loop_pre_header
      _
    $region3: #{tpu_custom_call.1} parent=1 // loop_header
      %s18 = sphi 0, %s22
      %p19 = scmp.ge.s32.totalorder %s18, 10
      %s25 = sphi 0, %s37
      %s26 = sphi 0, %s33
      %s27 = sphi 0, %s25
      %s28 = sphi 0, %s26
      %s29 = sphi 0, %s27
      %s30 = sphi 0, %s28
      %s40 = sphi 0, %s42
      %s43 = sphi 0, %s40
      %s44 = sphi 0, %s43
      %s60 = sphi 0, %s44
      %s66 = sphi 0, %s68
      %s69 = sphi 0, %s66
      %s70 = sphi 0, %s69
      %s86 = sphi 0, %s70
      %s92 = sphi 0, %s94
      %s95 = sphi 0, %s92
      %s96 = sphi 0, %s95
      %s112 = sphi 0, %s96
      %s118 = sphi 0, %s120
      %s121 = sphi 0, %s118
      %s122 = sphi 0, %s121
      %s138 = sphi 0, %s122
      %s144 = sphi 0, %s146
      %s147 = sphi 0, %s144
      %s148 = sphi 0, %s147
      %s164 = sphi 0, %s148
      %s170 = sphi 0, %s172
      %s173 = sphi 0, %s170
      %s174 = sphi 0, %s173
      %s190 = sphi 0, %s174
      %s196 = sphi 0, %s198
      %s199 = sphi 0, %s196
      %s200 = sphi 0, %s199
      %s216 = sphi 0, %s200
      %s222 = sphi 0, %s224
      %s225 = sphi 0, %s222
      %s226 = sphi 0, %s225
      %s242 = sphi 0, %s226
      %s246 = sphi 0, %s246
      %s248 = sphi 0, %s246
      %s249 = sphi 0, %s248
      %s263 = sphi 0, %s249
      %s269 = sphi 0, %s271
      %s272 = sphi 0, %s269
      %s273 = sphi 0, %s272
      %s289 = sphi 0, %s273
    $region4: #{tpu_custom_call.1} parent=1 // loop_header_branch
      %21 = sbr.rel (%p19) target = $region8
    $region5: #{tpu_custom_call.1} parent=1 // loop_body
      %s23 = ssub.s32 %s18, 1
      %s24 = ssub.s32 %s18, 2
      %s31 = sadd.s32 1, %s26
      %p32 = scmp.ge.s32.totalorder %s31, 4
      %s33 = scalar_select %p32, 0, %s31
      %s34 = sadd.s32 1, %s25
      %s35 = scalar_select %p32, %s34, %s25
      %p36 = scmp.ge.s32.totalorder %s35, 2
      %s37 = scalar_select %p36, 0, %s35
      %s38 = ssub.s32 %s25, %s37
      %p39 = scmp.eq.s32.totalorder %s38, 0
      %s41 = sadd.s32 %s40, 1
      %s42 = scalar_select %p39, %s40, %s41
      %p45 = pneg %p39
      %p46 = scmp.eq.s32.totalorder %s18, 7
      %p47 = por %p45, %p46
      %p48 = scmp.ne.s32.totalorder %s40, %s43
      %p49 = scmp.eq.s32.totalorder %s18, 0
      %p50 = por %p48, %p49
      %p51 = scmp.ne.s32.totalorder %s40, %s43
      %p52 = scmp.eq.s32.totalorder %s23, 7
      %p53 = por %p51, %p52
      %p54 = scmp.ne.s32.totalorder %s43, %s44
      %p55 = scmp.eq.s32.totalorder %s23, 0
      %p56 = por %p54, %p55
      %p57 = scmp.ne.s32.totalorder %s43, %s44
      %p58 = scmp.eq.s32.totalorder %s24, 7
      %p59 = por %p57, %p58
      %p61 = scmp.ne.s32.totalorder %s44, %s60
      %p62 = scmp.eq.s32.totalorder %s24, 0
      %p63 = por %p61, %p62
      %s64 = ssub.s32 %s26, %s33
      %p65 = scmp.eq.s32.totalorder %s64, 0
      %s67 = sadd.s32 %s66, 1
      %s68 = scalar_select %p65, %s66, %s67
      %p71 = pneg %p65
      %p72 = scmp.eq.s32.totalorder %s18, 7
      %p73 = por %p71, %p72
      %p74 = scmp.ne.s32.totalorder %s66, %s69
      %p75 = scmp.eq.s32.totalorder %s18, 0
      %p76 = por %p74, %p75
      %p77 = scmp.ne.s32.totalorder %s66, %s69
      %p78 = scmp.eq.s32.totalorder %s23, 7
      %p79 = por %p77, %p78
      %p80 = scmp.ne.s32.totalorder %s69, %s70
      %p81 = scmp.eq.s32.totalorder %s23, 0
      %p82 = por %p80, %p81
      %p83 = scmp.ne.s32.totalorder %s69, %s70
      %p84 = scmp.eq.s32.totalorder %s24, 7
      %p85 = por %p83, %p84
      %p87 = scmp.ne.s32.totalorder %s70, %s86
      %p88 = scmp.eq.s32.totalorder %s24, 0
      %p89 = por %p87, %p88
      %s90 = ssub.s32 %s26, %s33
      %p91 = scmp.eq.s32.totalorder %s90, 0
      %s93 = sadd.s32 %s92, 1
      %s94 = scalar_select %p91, %s92, %s93
      %p97 = pneg %p91
      %p98 = scmp.eq.s32.totalorder %s18, 7
      %p99 = por %p97, %p98
      %p100 = scmp.ne.s32.totalorder %s92, %s95
      %p101 = scmp.eq.s32.totalorder %s18, 0
      %p102 = por %p100, %p101
      %p103 = scmp.ne.s32.totalorder %s92, %s95
      %p104 = scmp.eq.s32.totalorder %s23, 7
      %p105 = por %p103, %p104
      %p106 = scmp.ne.s32.totalorder %s95, %s96
      %p107 = scmp.eq.s32.totalorder %s23, 0
      %p108 = por %p106, %p107
      %p109 = scmp.ne.s32.totalorder %s95, %s96
      %p110 = scmp.eq.s32.totalorder %s24, 7
      %p111 = por %p109, %p110
      %p113 = scmp.ne.s32.totalorder %s96, %s112
      %p114 = scmp.eq.s32.totalorder %s24, 0
      %p115 = por %p113, %p114
      %s116 = ssub.s32 %s26, %s33
      %p117 = scmp.eq.s32.totalorder %s116, 0
      %s119 = sadd.s32 %s118, 1
      %s120 = scalar_select %p117, %s118, %s119
      %p123 = pneg %p117
      %p124 = scmp.eq.s32.totalorder %s18, 7
      %p125 = por %p123, %p124
      %p126 = scmp.ne.s32.totalorder %s118, %s121
      %p127 = scmp.eq.s32.totalorder %s18, 0
      %p128 = por %p126, %p127
      %p129 = scmp.ne.s32.totalorder %s118, %s121
      %p130 = scmp.eq.s32.totalorder %s23, 7
      %p131 = por %p129, %p130
      %p132 = scmp.ne.s32.totalorder %s121, %s122
      %p133 = scmp.eq.s32.totalorder %s23, 0
      %p134 = por %p132, %p133
      %p135 = scmp.ne.s32.totalorder %s121, %s122
      %p136 = scmp.eq.s32.totalorder %s24, 7
      %p137 = por %p135, %p136
      %p139 = scmp.ne.s32.totalorder %s122, %s138
      %p140 = scmp.eq.s32.totalorder %s24, 0
      %p141 = por %p139, %p140
      %s142 = ssub.s32 %s26, %s33
      %p143 = scmp.eq.s32.totalorder %s142, 0
      %s145 = sadd.s32 %s144, 1
      %s146 = scalar_select %p143, %s144, %s145
      %p149 = pneg %p143
      %p150 = scmp.eq.s32.totalorder %s18, 7
      %p151 = por %p149, %p150
      %p152 = scmp.ne.s32.totalorder %s144, %s147
      %p153 = scmp.eq.s32.totalorder %s18, 0
      %p154 = por %p152, %p153
      %p155 = scmp.ne.s32.totalorder %s144, %s147
      %p156 = scmp.eq.s32.totalorder %s23, 7
      %p157 = por %p155, %p156
      %p158 = scmp.ne.s32.totalorder %s147, %s148
      %p159 = scmp.eq.s32.totalorder %s23, 0
      %p160 = por %p158, %p159
      %p161 = scmp.ne.s32.totalorder %s147, %s148
      %p162 = scmp.eq.s32.totalorder %s24, 7
      %p163 = por %p161, %p162
      %p165 = scmp.ne.s32.totalorder %s148, %s164
      %p166 = scmp.eq.s32.totalorder %s24, 0
      %p167 = por %p165, %p166
      %s168 = ssub.s32 %s26, %s33
      %p169 = scmp.eq.s32.totalorder %s168, 0
      %s171 = sadd.s32 %s170, 1
      %s172 = scalar_select %p169, %s170, %s171
      %p175 = pneg %p169
      %p176 = scmp.eq.s32.totalorder %s18, 7
      %p177 = por %p175, %p176
      %p178 = scmp.ne.s32.totalorder %s170, %s173
      %p179 = scmp.eq.s32.totalorder %s18, 0
      %p180 = por %p178, %p179
      %p181 = scmp.ne.s32.totalorder %s170, %s173
      %p182 = scmp.eq.s32.totalorder %s23, 7
      %p183 = por %p181, %p182
      %p184 = scmp.ne.s32.totalorder %s173, %s174
      %p185 = scmp.eq.s32.totalorder %s23, 0
      %p186 = por %p184, %p185
      %p187 = scmp.ne.s32.totalorder %s173, %s174
      %p188 = scmp.eq.s32.totalorder %s24, 7
      %p189 = por %p187, %p188
      %p191 = scmp.ne.s32.totalorder %s174, %s190
      %p192 = scmp.eq.s32.totalorder %s24, 0
      %p193 = por %p191, %p192
      %s194 = ssub.s32 %s26, %s33
      %p195 = scmp.eq.s32.totalorder %s194, 0
      %s197 = sadd.s32 %s196, 1
      %s198 = scalar_select %p195, %s196, %s197
      %p201 = pneg %p195
      %p202 = scmp.eq.s32.totalorder %s18, 7
      %p203 = por %p201, %p202
      %p204 = scmp.ne.s32.totalorder %s196, %s199
      %p205 = scmp.eq.s32.totalorder %s18, 0
      %p206 = por %p204, %p205
      %p207 = scmp.ne.s32.totalorder %s196, %s199
      %p208 = scmp.eq.s32.totalorder %s23, 7
      %p209 = por %p207, %p208
      %p210 = scmp.ne.s32.totalorder %s199, %s200
      %p211 = scmp.eq.s32.totalorder %s23, 0
      %p212 = por %p210, %p211
      %p213 = scmp.ne.s32.totalorder %s199, %s200
      %p214 = scmp.eq.s32.totalorder %s24, 7
      %p215 = por %p213, %p214
      %p217 = scmp.ne.s32.totalorder %s200, %s216
      %p218 = scmp.eq.s32.totalorder %s24, 0
      %p219 = por %p217, %p218
      %s220 = ssub.s32 %s26, %s33
      %p221 = scmp.eq.s32.totalorder %s220, 0
      %s223 = sadd.s32 %s222, 1
      %s224 = scalar_select %p221, %s222, %s223
      %p227 = pneg %p221
      %p228 = scmp.eq.s32.totalorder %s18, 7
      %p229 = por %p227, %p228
      %p230 = scmp.ne.s32.totalorder %s222, %s225
      %p231 = scmp.eq.s32.totalorder %s18, 0
      %p232 = por %p230, %p231
      %p233 = scmp.ne.s32.totalorder %s222, %s225
      %p234 = scmp.eq.s32.totalorder %s23, 7
      %p235 = por %p233, %p234
      %p236 = scmp.ne.s32.totalorder %s225, %s226
      %p237 = scmp.eq.s32.totalorder %s23, 0
      %p238 = por %p236, %p237
      %p239 = scmp.ne.s32.totalorder %s225, %s226
      %p240 = scmp.eq.s32.totalorder %s24, 7
      %p241 = por %p239, %p240
      %p243 = scmp.ne.s32.totalorder %s226, %s242
      %p244 = scmp.eq.s32.totalorder %s24, 0
      %p245 = por %p243, %p244
      %s247 = sadd.s32 %s246, 1
      %p250 = scmp.eq.s32.totalorder %s18, 7
      %p251 = scmp.ne.s32.totalorder %s246, %s248
      %p252 = scmp.eq.s32.totalorder %s18, 0
      %p253 = por %p251, %p252
      %p254 = scmp.ne.s32.totalorder %s246, %s248
      %p255 = scmp.eq.s32.totalorder %s23, 7
      %p256 = por %p254, %p255
      %p257 = scmp.ne.s32.totalorder %s248, %s249
      %p258 = scmp.eq.s32.totalorder %s23, 0
      %p259 = por %p257, %p258
      %p260 = scmp.ne.s32.totalorder %s248, %s249
      %p261 = scmp.eq.s32.totalorder %s24, 7
      %p262 = por %p260, %p261
      %p264 = scmp.ne.s32.totalorder %s249, %s263
      %p265 = scmp.eq.s32.totalorder %s24, 0
      %p266 = por %p264, %p265
      %s267 = ssub.s32 %s25, %s37
      %p268 = scmp.eq.s32.totalorder %s267, 0
      %s270 = sadd.s32 %s269, 1
      %s271 = scalar_select %p268, %s269, %s270
      %p274 = pneg %p268
      %p275 = scmp.eq.s32.totalorder %s18, 7
      %p276 = por %p274, %p275
      %p277 = scmp.ne.s32.totalorder %s269, %s272
      %p278 = scmp.eq.s32.totalorder %s18, 0
      %p279 = por %p277, %p278
      %p280 = scmp.ne.s32.totalorder %s269, %s272
      %p281 = scmp.eq.s32.totalorder %s23, 7
      %p282 = por %p280, %p281
      %p283 = scmp.ne.s32.totalorder %s272, %s273
      %p284 = scmp.eq.s32.totalorder %s23, 0
      %p285 = por %p283, %p284
      %p286 = scmp.ne.s32.totalorder %s272, %s273
      %p287 = scmp.eq.s32.totalorder %s24, 7
      %p288 = por %p286, %p287
      %p290 = scmp.ne.s32.totalorder %s273, %s289
      %p291 = scmp.eq.s32.totalorder %s24, 0
      %p292 = por %p290, %p291
      %p293 = scmp.le.s32.totalorder 1, %s18
      %p294 = scmp.lt.s32.totalorder %s18, 9
      %p295 = pnand %p293, %p294
      %p296 = pneg %p295
      // Predicated region
      $region9: #{tpu_custom_call.1} parent=5 // pred_check
        _
      $region10: #{tpu_custom_call.1} parent=5 // pred_check_branch
        %298 = sbr.rel (%p295) target = $region12
      $region11: #{tpu_custom_call.1} parent=5 // pred_region
        %s299 = ssub.s32 %s18, 1
        // Predicated region
        $region13: #{tpu_custom_call.1} parent=11 // pred_check
          %p300 = pneg %p259
        $region14: #{tpu_custom_call.1} parent=11 // pred_check_branch
          %302 = sbr.rel (%p300) target = $region16
        $region15: #{tpu_custom_call.1} parent=11 // pred_region
          _
        $region16: #{tpu_custom_call.1} parent=11 // pred_fallthru
          _
      $region12: #{tpu_custom_call.1} parent=5 // pred_fallthru
        _
      %p303 = scmp.lt.s32.totalorder %s18, 8
      // Predicated region
      $region17: #{tpu_custom_call.1} parent=5 // pred_check
        %p304 = pneg %p303
      $region18: #{tpu_custom_call.1} parent=5 // pred_check_branch
        %306 = sbr.rel (%p304) target = $region20
      $region19: #{tpu_custom_call.1} parent=5 // pred_region
        // Predicated region
        $region21: #{tpu_custom_call.1} parent=19 // pred_check
          %p307 = pneg %p50
        $region22: #{tpu_custom_call.1} parent=19 // pred_check_branch
          %309 = sbr.rel (%p307) target = $region24
        $region23: #{tpu_custom_call.1} parent=19 // pred_region
          %p310 = scmp.lt.s32.totalorder %s25, 1
          %s311 = scalar_select %p310, %s25, 1
          %s312 = smul.addr %s311, 8
          %s313 = scalar_lea.vmem %s0, %s312
        $region24: #{tpu_custom_call.1} parent=19 // pred_fallthru
          _
        // Predicated region
        $region25: #{tpu_custom_call.1} parent=19 // pred_check
          %p314 = pneg %p76
        $region26: #{tpu_custom_call.1} parent=19 // pred_check_branch
          %316 = sbr.rel (%p314) target = $region28
        $region27: #{tpu_custom_call.1} parent=19 // pred_region
          %p317 = scmp.lt.s32.totalorder %s26, 3
          %s318 = scalar_select %p317, %s26, 3
          %s319 = smul.addr %s318, 4
          %s320 = smul.addr %s319, 4
          %s321 = scalar_lea.vmem %s1, %s320
        $region28: #{tpu_custom_call.1} parent=19 // pred_fallthru
          _
        // Predicated region
        $region29: #{tpu_custom_call.1} parent=19 // pred_check
          %p322 = pneg %p102
        $region30: #{tpu_custom_call.1} parent=19 // pred_check_branch
          %324 = sbr.rel (%p322) target = $region32
        $region31: #{tpu_custom_call.1} parent=19 // pred_region
          %p325 = scmp.lt.s32.totalorder %s26, 3
          %s326 = scalar_select %p325, %s26, 3
          %s327 = scalar_lea.vmem %s2, %s326
        $region32: #{tpu_custom_call.1} parent=19 // pred_fallthru
          _
        // Predicated region
        $region33: #{tpu_custom_call.1} parent=19 // pred_check
          %p328 = pneg %p128
        $region34: #{tpu_custom_call.1} parent=19 // pred_check_branch
          %330 = sbr.rel (%p328) target = $region36
        $region35: #{tpu_custom_call.1} parent=19 // pred_region
          %p331 = scmp.lt.s32.totalorder %s26, 3
          %s332 = scalar_select %p331, %s26, 3
          %s333 = smul.addr %s332, 4
          %s334 = smul.addr %s333, 4
          %s335 = scalar_lea.vmem %s3, %s334
        $region36: #{tpu_custom_call.1} parent=19 // pred_fallthru
          _
        // Predicated region
        $region37: #{tpu_custom_call.1} parent=19 // pred_check
          %p336 = pneg %p154
        $region38: #{tpu_custom_call.1} parent=19 // pred_check_branch
          %338 = sbr.rel (%p336) target = $region40
        $region39: #{tpu_custom_call.1} parent=19 // pred_region
          %p339 = scmp.lt.s32.totalorder %s26, 3
          %s340 = scalar_select %p339, %s26, 3
          %s341 = scalar_lea.vmem %s4, %s340
        $region40: #{tpu_custom_call.1} parent=19 // pred_fallthru
          _
        // Predicated region
        $region41: #{tpu_custom_call.1} parent=19 // pred_check
          %p342 = pneg %p180
        $region42: #{tpu_custom_call.1} parent=19 // pred_check_branch
          %344 = sbr.rel (%p342) target = $region44
        $region43: #{tpu_custom_call.1} parent=19 // pred_region
          %p345 = scmp.lt.s32.totalorder %s26, 3
          %s346 = scalar_select %p345, %s26, 3
          %s347 = smul.addr %s346, 4
          %s348 = smul.addr %s347, 4
          %s349 = scalar_lea.vmem %s5, %s348
        $region44: #{tpu_custom_call.1} parent=19 // pred_fallthru
          _
        // Predicated region
        $region45: #{tpu_custom_call.1} parent=19 // pred_check
          %p350 = pneg %p206
        $region46: #{tpu_custom_call.1} parent=19 // pred_check_branch
          %352 = sbr.rel (%p350) target = $region48
        $region47: #{tpu_custom_call.1} parent=19 // pred_region
          %p353 = scmp.lt.s32.totalorder %s26, 3
          %s354 = scalar_select %p353, %s26, 3
          %s355 = scalar_lea.vmem %s6, %s354
        $region48: #{tpu_custom_call.1} parent=19 // pred_fallthru
          _
        // Predicated region
        $region49: #{tpu_custom_call.1} parent=19 // pred_check
          %p356 = pneg %p232
        $region50: #{tpu_custom_call.1} parent=19 // pred_check_branch
          %358 = sbr.rel (%p356) target = $region52
        $region51: #{tpu_custom_call.1} parent=19 // pred_region
          %p359 = scmp.lt.s32.totalorder %s26, 3
          %s360 = scalar_select %p359, %s26, 3
          %s361 = smul.addr %s360, 4
          %s362 = scalar_lea.vmem %s7, %s361
        $region52: #{tpu_custom_call.1} parent=19 // pred_fallthru
          _
      $region20: #{tpu_custom_call.1} parent=5 // pred_fallthru
        _
      %p363 = scmp.le.s32.totalorder 1, %s18
      %p364 = scmp.lt.s32.totalorder %s18, 9
      %p365 = pnand %p363, %p364
      %p366 = pneg %p365
      // Predicated region
      $region53: #{tpu_custom_call.1} parent=5 // pred_check
        _
      $region54: #{tpu_custom_call.1} parent=5 // pred_check_branch
        %368 = sbr.rel (%p365) target = $region56
      $region55: #{tpu_custom_call.1} parent=5 // pred_region
        %s369 = ssub.s32 %s18, 1
        %p370 = scmp.lt.s32.totalorder %s27, 1
        %s371 = scalar_select %p370, %s27, 1
        %s372 = smul.addr %s371, 8
        %s373 = scalar_lea.vmem %s0, %s372
        %p374 = pneg %p56
        %p375 = pneg %p53
        %p376 = scmp.lt.s32.totalorder %s28, 3
        %s377 = scalar_select %p376, %s28, 3
        %s378 = smul.addr %s377, 4
        %s379 = smul.addr %s378, 4
        %s380 = scalar_lea.vmem %s1, %s379
        %p381 = pneg %p82
        %p382 = pneg %p79
        %p383 = scmp.lt.s32.totalorder %s28, 3
        %s384 = scalar_select %p383, %s28, 3
        %s385 = scalar_lea.vmem %s2, %s384
        %p386 = pneg %p108
        %p387 = pneg %p105
        %p388 = scmp.lt.s32.totalorder %s28, 3
        %s389 = scalar_select %p388, %s28, 3
        %s390 = smul.addr %s389, 4
        %s391 = smul.addr %s390, 4
        %s392 = scalar_lea.vmem %s3, %s391
        %p393 = pneg %p134
        %p394 = pneg %p131
        %p395 = scmp.lt.s32.totalorder %s28, 3
        %s396 = scalar_select %p395, %s28, 3
        %s397 = scalar_lea.vmem %s4, %s396
        %p398 = pneg %p160
        %p399 = pneg %p157
        %p400 = scmp.lt.s32.totalorder %s28, 3
        %s401 = scalar_select %p400, %s28, 3
        %s402 = smul.addr %s401, 4
        %s403 = smul.addr %s402, 4
        %s404 = scalar_lea.vmem %s5, %s403
        %p405 = pneg %p186
        %p406 = pneg %p183
        %p407 = scmp.lt.s32.totalorder %s28, 3
        %s408 = scalar_select %p407, %s28, 3
        %s409 = scalar_lea.vmem %s6, %s408
        %p410 = pneg %p212
        %p411 = pneg %p209
        %p412 = scmp.lt.s32.totalorder %s28, 3
        %s413 = scalar_select %p412, %s28, 3
        %s414 = smul.addr %s413, 4
        %s415 = scalar_lea.vmem %s7, %s414
        %p416 = pneg %p238
        %p417 = pneg %p235
        %p418 = pneg %p259
        %p419 = pneg %p256
        %p420 = pneg %p285
        %p421 = pneg %p282
        %s422 = sand.u32 %s272, 1
        %s423 = scalar_lea.sflag [#allocation3], %s422
        %s424 = sand.u32 %s272, 1
        %s425 = smul.addr %s424, 8
        %s426 = scalar_lea.vmem [#allocation2], %s425
        %p427 = scmp.lt.s32.totalorder %s27, 1
        %s428 = scalar_select %p427, %s27, 1
        %s429 = smul.addr %s428, 8
        %s430 = scalar_lea.vmem %s0, %s429
        %p431 = scmp.lt.s32.totalorder %s28, 3
        %s432 = scalar_select %p431, %s28, 3
        %s433 = smul.addr %s432, 4
        %s434 = smul.addr %s433, 4
        %s435 = scalar_lea.vmem %s1, %s434
        %p436 = scmp.lt.s32.totalorder %s28, 3
        %s437 = scalar_select %p436, %s28, 3
        %s438 = scalar_lea.vmem %s2, %s437
        %p439 = scmp.lt.s32.totalorder %s28, 3
        %s440 = scalar_select %p439, %s28, 3
        %s441 = smul.addr %s440, 4
        %s442 = smul.addr %s441, 4
        %s443 = scalar_lea.vmem %s3, %s442
        %p444 = scmp.lt.s32.totalorder %s28, 3
        %s445 = scalar_select %p444, %s28, 3
        %s446 = scalar_lea.vmem %s4, %s445
        %p447 = scmp.lt.s32.totalorder %s28, 3
        %s448 = scalar_select %p447, %s28, 3
        %s449 = smul.addr %s448, 4
        %s450 = smul.addr %s449, 4
        %s451 = scalar_lea.vmem %s5, %s450
        %p452 = scmp.lt.s32.totalorder %s28, 3
        %s453 = scalar_select %p452, %s28, 3
        %s454 = scalar_lea.vmem %s6, %s453
        %p455 = scmp.lt.s32.totalorder %s28, 3
        %s456 = scalar_select %p455, %s28, 3
        %s457 = smul.addr %s456, 4
        %s458 = scalar_lea.vmem %s7, %s457
        %v460 = vld [vmem:[%s430] sm:$0xff]
        %v461 = vpack.c.bf16 %v460, %v460
        %v462 = vld [vmem:[%s435] sm:$0xf]
        %v463 = vld [vmem:[%s435 + $0x4] sm:$0xf]
        %v464 = vld [vmem:[%s435 + $0x8] sm:$0xf]
        %v465 = vld [vmem:[%s435 + $0xc] sm:$0xf]
        %v466 = vld [vmem:[%s438] sm:$0x1]
        %v468 = vperm.slane %v466, 0
        %v474 = vunpack.c.l.b16 %v462
        %v475 = vunpack.c.l.b16 %v463
        %v476 = vunpack.c.l.b16 %v464
        %v477 = vunpack.c.l.b16 %v465
        %v478 = vpack.c.b16 %v475, %v474
        %v479 = vpack.c.b16 %v477, %v476
        %vm482 = vcmask 261120
        %v484 = vsel %vm482, %v461, 0
        %486 = vmatpush.bf16.msra.mxu0 0
        %487 = vmatpush.bf16.msra.mxu0 0
        %488 = vmatpush.bf16.msra.mxu0 0
        %489 = vmatpush.bf16.msra.mxu0 0
        %490 = vmatpush.bf16.msra.mxu0 0
        %491 = vmatpush.bf16.msra.mxu0 0
        %492 = vmatpush.bf16.msra.mxu0 %v479
        %493 = vmatpush.bf16.msra.mxu0 %v478
        %494 = vmatmul.bf16.gmra.mxu0 %v484
        %v495 = vpop.f32.mrf.mxu0
        %v496 = vadd.f32 %v468, %v495
        %v497 = vpop.f32.mrf.mxu0
        %498 = vdwg.mxu0
        %v499 = vld [vmem:[%s443] sm:$0xf]
        %v500 = vld [vmem:[%s443 + $0x4] sm:$0xf]
        %v501 = vld [vmem:[%s443 + $0x8] sm:$0xf]
        %v502 = vld [vmem:[%s443 + $0xc] sm:$0xf]
        %v503 = vld [vmem:[%s446] sm:$0x1]
        %v505 = vperm.slane %v503, 0
        %v511 = vunpack.c.l.b16 %v499
        %v512 = vunpack.c.l.b16 %v500
        %v513 = vunpack.c.l.b16 %v501
        %v514 = vunpack.c.l.b16 %v502
        %v515 = vpack.c.b16 %v512, %v511
        %v516 = vpack.c.b16 %v514, %v513
        %519 = vmatpush.bf16.msra.mxu0 0
        %520 = vmatpush.bf16.msra.mxu0 0
        %521 = vmatpush.bf16.msra.mxu0 0
        %522 = vmatpush.bf16.msra.mxu0 0
        %523 = vmatpush.bf16.msra.mxu0 0
        %524 = vmatpush.bf16.msra.mxu0 0
        %525 = vmatpush.bf16.msra.mxu0 %v516
        %526 = vmatpush.bf16.msra.mxu0 %v515
        %527 = vmatmul.bf16.gmra.mxu0 %v484
        %v528 = vpop.f32.mrf.mxu0
        %v529 = vadd.f32 %v505, %v528
        %v530 = vpop.f32.mrf.mxu0
        %531 = vdwg.mxu0
        %v532 = vld [vmem:[%s451] sm:$0xf]
        %v533 = vld [vmem:[%s451 + $0x4] sm:$0xf]
        %v534 = vld [vmem:[%s451 + $0x8] sm:$0xf]
        %v535 = vld [vmem:[%s451 + $0xc] sm:$0xf]
        %v536 = vld [vmem:[%s454] sm:$0x1]
        %v538 = vperm.slane %v536, 0
        %v544 = vunpack.c.l.b16 %v532
        %v545 = vunpack.c.l.b16 %v533
        %v546 = vunpack.c.l.b16 %v534
        %v547 = vunpack.c.l.b16 %v535
        %v548 = vpack.c.b16 %v545, %v544
        %v549 = vpack.c.b16 %v547, %v546
        %552 = vmatpush.bf16.msra.mxu0 0
        %553 = vmatpush.bf16.msra.mxu0 0
        %554 = vmatpush.bf16.msra.mxu0 0
        %555 = vmatpush.bf16.msra.mxu0 0
        %556 = vmatpush.bf16.msra.mxu0 0
        %557 = vmatpush.bf16.msra.mxu0 0
        %558 = vmatpush.bf16.msra.mxu0 %v549
        %559 = vmatpush.bf16.msra.mxu0 %v548
        %560 = vmatmul.bf16.gmra.mxu0 %v484
        %v561 = vpop.f32.mrf.mxu0
        %v562 = vadd.f32 %v538, %v561
        %v563 = vpop.f32.mrf.mxu0
        %564 = vdwg.mxu0
        %v565 = vmul.f32 %v496, 0.17677669
        %v566 = vpack.c.bf16 %v565, %v565
        %v567 = vpack.c.bf16 %v529, %v529
        %vm568 = vcmask 64512
        %v570 = vsel %vm568, %v566, 0
        %v573 = vsel %vm568, %v567, 0
        %575 = vmatpush.bf16.xpose.msra.mxu0 0
        %576 = vmatpush.bf16.xpose.msra.mxu0 0
        %577 = vmatpush.bf16.xpose.msra.mxu0 0
        %578 = vmatpush.bf16.xpose.msra.mxu0 0
        %579 = vmatpush.bf16.xpose.msra.mxu0 0
        %580 = vmatpush.bf16.xpose.msra.mxu0 0
        %581 = vmatpush.bf16.xpose.msra.mxu0 0
        %582 = vmatpush.bf16.xpose.msra.mxu0 %v573
        %583 = vmatmul.bf16.gmra.mxu0 %v570
        %v584 = vpop.f32.mrf.mxu0
        %v585 = vadd.f32 0.0, %v584
        %v586 = vpop.f32.mrf.mxu0
        %587 = vdwg.mxu0
        %v588 = vsel %vm568, %v585, -inf
        %589 = vmax.xlane.f32.xlu0 %v588
        %v590 = vpop.xlane.xlu0 %589
        %v591 = vsub.f32 %v585, %v590
        %v592 = vmul.f32 %v591, 1.442695
        %v593 = vpow.pop %v592
        %v594 = vsel %vm568, %v593, 0.0
        %595 = vadd.xlane.f32.xlu0 %v594
        %v596 = vpop.xlane.xlu0 %595
        %v597 = vrcp.pop %v596
        %v598 = vmul.f32 %v593, %v597
        %v599 = vpack.c.bf16 %v598, %v598
        %v600 = vpack.c.bf16 %v562, %v562
        %v602 = vsel %vm568, %v599, 0
        %vm604 = vcmask 1043456
        %v606 = vsel %vm604, %v600, 0
        %608 = vmatpush.bf16.msra.mxu0 0
        %609 = vmatpush.bf16.msra.mxu0 0
        %610 = vmatpush.bf16.msra.mxu0 0
        %611 = vmatpush.bf16.msra.mxu0 0
        %612 = vmatpush.bf16.msra.mxu0 0
        %613 = vmatpush.bf16.msra.mxu0 0
        %614 = vmatpush.bf16.msra.mxu0 0
        %615 = vmatpush.bf16.msra.mxu0 %v606
        %616 = vmatmul.bf16.gmra.mxu0 %v602
        %v617 = vpop.f32.mrf.mxu0
        %v618 = vadd.f32 0.0, %v617
        %v619 = vpop.f32.mrf.mxu0
        %620 = vdwg.mxu0
        %v621 = vpack.c.bf16 %v618, %v618
        %v622 = vld [vmem:[%s458] sm:$0xf]
        %v624 = vsel %vm568, %v621, 0
        %v627 = vsel %vm604, %v622, 0
        %629 = vmatpush.bf16.msra.mxu0 0
        %630 = vmatpush.bf16.msra.mxu0 0
        %631 = vmatpush.bf16.msra.mxu0 0
        %632 = vmatpush.bf16.msra.mxu0 0
        %633 = vmatpush.bf16.msra.mxu0 0
        %634 = vmatpush.bf16.msra.mxu0 0
        %635 = vmatpush.bf16.msra.mxu0 0
        %636 = vmatpush.bf16.msra.mxu0 %v627
        %637 = vmatmul.bf16.gmra.mxu0 %v624
        %v638 = vpop.f32.mrf.mxu0
        %v639 = vadd.f32 0.0, %v638
        %v640 = vpop.f32.mrf.mxu0
        %641 = vdwg.mxu0
        %p642 = scmp.eq.s32.totalorder %s28, 0
        // Predicated region
        $region57: #{tpu_custom_call.1} parent=55 // pred_check
          %p643 = pneg %p642
        $region58: #{tpu_custom_call.1} parent=55 // pred_check_branch
          %645 = sbr.rel (%p643) target = $region60
        $region59: #{tpu_custom_call.1} parent=55 // pred_region
          %v646 = vld [vmem:[%s8] sm:$0x1]
          %v648 = vperm.slane %v646, 0
          %v650 = vadd.f32 %v639, %v648
          %651 = vst.msk [vmem:[%s426] sm:$0xff] %vm482, %v650
        $region60: #{tpu_custom_call.1} parent=55 // pred_fallthru
          _
        %p652 = scmp.gt.s32.totalorder %s28, 0
        // Predicated region
        $region61: #{tpu_custom_call.1} parent=55 // pred_check
          %p653 = pneg %p652
        $region62: #{tpu_custom_call.1} parent=55 // pred_check_branch
          %655 = sbr.rel (%p653) target = $region64
        $region63: #{tpu_custom_call.1} parent=55 // pred_region
          %v656 = vld [vmem:[%s426] sm:$0xff]
          %v657 = vadd.f32 %v656, %v639
          %658 = vst.msk [vmem:[%s426] sm:$0xff] %vm482, %v657
        $region64: #{tpu_custom_call.1} parent=55 // pred_fallthru
          _
        %s659 = sand.u32 %s272, 1
        %s660 = scalar_lea.sflag [#allocation3], %s659
        %s661 = sand.u32 %s272, 1
        %s662 = smul.addr %s661, 8
        %s663 = scalar_lea.vmem [#allocation2], %s662
        // Predicated region
        $region65: #{tpu_custom_call.1} parent=55 // pred_check
          %p664 = pneg %p282
        $region66: #{tpu_custom_call.1} parent=55 // pred_check_branch
          %666 = sbr.rel (%p664) target = $region68
        $region67: #{tpu_custom_call.1} parent=55 // pred_region
          %668 = vsyncadd %s660, 0
          %s669 = smul.addr %s27, 8
          %s670 = scalar_lea.hbm %s9, %s669
          %s672 = sshll.u32 %s663, 4
          %s673 = int_to_ptr.vmem [resolvable:$true] %s672
          %s674 = sshll.u32 %s670, 4
          %s675 = int_to_ptr.hbm [resolvable:$true] %s674
          %677 = dma.vmem_to_hbm [thread:$0]  %s673, 128, %s675, %s660
        $region68: #{tpu_custom_call.1} parent=55 // pred_fallthru
          _
      $region56: #{tpu_custom_call.1} parent=5 // pred_fallthru
        _
      %p678 = scmp.le.s32.totalorder 2, %s18
      // Predicated region
      $region69: #{tpu_custom_call.1} parent=5 // pred_check
        %p679 = pneg %p678
      $region70: #{tpu_custom_call.1} parent=5 // pred_check_branch
        %681 = sbr.rel (%p679) target = $region72
      $region71: #{tpu_custom_call.1} parent=5 // pred_region
        %s682 = ssub.s32 %s18, 2
        // Predicated region
        $region73: #{tpu_custom_call.1} parent=71 // pred_check
          %p683 = pneg %p288
        $region74: #{tpu_custom_call.1} parent=71 // pred_check_branch
          %685 = sbr.rel (%p683) target = $region76
        $region75: #{tpu_custom_call.1} parent=71 // pred_region
          %s686 = sand.u32 %s273, 1
          %s687 = scalar_lea.sflag [#allocation3], %s686
          %s688 = sand.u32 %s273, 1
          %s689 = smul.addr %s688, 8
          %s690 = scalar_lea.vmem [#allocation2], %s689
          %692 = dma.done %s687, 128
        $region76: #{tpu_custom_call.1} parent=71 // pred_fallthru
          _
      $region72: #{tpu_custom_call.1} parent=5 // pred_fallthru
        _
    $region6: #{tpu_custom_call.1} parent=1 // loop_footer
      %s22 = sadd.s32 1, %s18
    $region7: #{tpu_custom_call.1} parent=1 // loop_footer_branch
      %17 = sbr.rel target = $region3
    $region8: #{tpu_custom_call.1} parent=1 // loop_exit
      _
    %693 = vsyncpa [#allocation3], 1
    %s694 = scalar_lea.sflag [#allocation3], 1
    %695 = vsyncpa %s694, 1

</llo_original>
